<compile_context>
chip_gen: v6e
topology: v6e:2x2x1
jax: 0.10.0
libtpu: 0.0.40
codegen_flags: <defaults>
</compile_context>

<pallas_src>
import jax
import jax.numpy as jnp
from jax.experimental import pallas as pl
from jax.experimental.pallas import tpu as pltpu


def _round_up(x, m):
    return ((x + m - 1) // m) * m


# --------------------------------------------------------------------------- #
# Kernel
# --------------------------------------------------------------------------- #
def ffn_kernel(x_ref, w1_ref, b1_ref, w2_ref, b2_ref, o_ref, acc_ref):
    j = pl.program_id(1)

    # First matmul on a (H, tn) column slab of W1  ->  (tm, tn) f32 on the MXU.
    h = jnp.dot(x_ref[...], w1_ref[...], preferred_element_type=jnp.float32)
    # Bias + ReLU in f32 on the VPU.
    h = jnp.maximum(h + b1_ref[...], 0.0)
    # Second matmul: partial (tm, H) contribution of this 4H slab.
    partial = jnp.dot(h.astype(w2_ref.dtype), w2_ref[...],
                      preferred_element_type=jnp.float32)

    # No explicit zero-init pass: overwrite on the first slab, accumulate after.
    @pl.when(j == 0)
    def _():
        acc_ref[...] = partial

    @pl.when(j > 0)
    def _():
        acc_ref[...] += partial

    @pl.when(j == pl.num_programs(1) - 1)
    def _():
        o_ref[...] = (acc_ref[...] + b2_ref[...]).astype(o_ref.dtype)


# --------------------------------------------------------------------------- #
# Generation-aware tiling
# --------------------------------------------------------------------------- #
def _vmem_capacity_bytes():
    try:
        return int(pltpu.get_tpu_info().vmem_capacity_bytes)
    except Exception:
        return 64 * 1024 * 1024  # conservative (v7x per-TensorCore VMEM)


def _vmem_bytes(tm, tn, h_pad, out_itemsize):
    acc = tm * h_pad * 4                      # f32 accumulator (single buffer)
    x_db = 2 * tm * h_pad * 2                 # bf16 x tile, double buffered
    w1_db = 2 * h_pad * tn * 2                # bf16 W1 slab, double buffered
    w2_db = 2 * tn * h_pad * 2                # bf16 W2 slab, double buffered
    b_db = 2 * (tn + h_pad) * 4               # f32 bias slabs
    out_db = 2 * tm * h_pad * out_itemsize    # output tile, double buffered
    return acc + x_db + w1_db + w2_db + b_db + out_db


def _choose_tiles(m, h_pad, h4_pad, out_itemsize):
    vmem_cap = _vmem_capacity_bytes()
    budget = int(0.7 * vmem_cap)              # headroom for Mosaic scratch

    # tn: largest <=1024 multiple of 128 that divides the padded 4H.
    tn_cands = [c for c in (1024, 896, 768, 640, 512, 384, 256, 128)
                if h4_pad % c == 0] or [h4_pad]

    tm, tn = 16, tn_cands[-1]
    # Prefer large tm (weight re-streaming ~ 1/tm), then as large a tn as fits.
    for tm_c in (1024, 768, 512, 384, 256, 128, 64, 32, 16):
        found = False
        for tn_c in tn_cands:
            if _vmem_bytes(tm_c, tn_c, h_pad, out_itemsize) <= budget:
                tm, tn, found = tm_c, tn_c, True
                break
        if found:
            break

    # Never use a row tile larger than the (16-aligned) problem.
    tm = min(tm, max(16, _round_up(m, 16)))
    # Megacore (v7x: 2 TCs): keep >=2 tiles on the "parallel" row axis whenever
    # there is enough work to split; harmless on single-TC chips.
    if m >= 256:
        tm = min(tm, _round_up((m + 1) // 2, 16))

    vmem_limit = int(0.9 * vmem_cap)
    return tm, tn, vmem_limit


# --------------------------------------------------------------------------- #
# Parameter preparation (one-time) and forward wrapper
# --------------------------------------------------------------------------- #
def prepare_ffn_params(w1, b1, w2, b2):
    """One-time: pad H / 4H to multiples of 128 (lane-dense MXU tiles) and
    pre-cast the matmul operands to bf16.  Biases stay f32.
    Weights are stored transposed w.r.t. torch.nn.Linear.weight:
      w1: (H, 4H), b1: (4H,), w2: (4H, H), b2: (H,)."""
    h, h4 = w1.shape
    assert w2.shape == (h4, h) and b1.shape == (h4,) and b2.shape == (h,)
    h_pad = _round_up(h, 128)
    h4_pad = _round_up(h4, 128)
    w1p = jnp.zeros((h_pad, h4_pad), jnp.bfloat16).at[:h, :h4].set(
        w1.astype(jnp.bfloat16))
    w2p = jnp.zeros((h4_pad, h_pad), jnp.bfloat16).at[:h4, :h].set(
        w2.astype(jnp.bfloat16))
    b1p = jnp.zeros((1, h4_pad), jnp.float32).at[0, :h4].set(
        b1.astype(jnp.float32))
    b2p = jnp.zeros((1, h_pad), jnp.float32).at[0, :h].set(
        b2.astype(jnp.float32))
    return {"w1": w1p, "b1": b1p, "w2": w2p, "b2": b2p, "hidden": h}


def ffn_forward(x, params, *, tm=None, tn=None):
    """x: (batch, seq, hidden).  params from prepare_ffn_params().
    Returns (batch, seq, hidden) in x.dtype."""
    b, s, h = x.shape
    assert h == params["hidden"]
    w1, b1, w2, b2 = params["w1"], params["b1"], params["w2"], params["b2"]
    h_pad, h4_pad = w1.shape

    out_dtype = x.dtype
    out_itemsize = jnp.dtype(out_dtype).itemsize
    m = b * s

    tm_auto, tn_auto, vmem_limit = _choose_tiles(m, h_pad, h4_pad, out_itemsize)
    tm = tm_auto if tm is None else tm
    tn = tn_auto if tn is None else tn
    assert h4_pad % tn == 0 and tm % 8 == 0

    m_pad = _round_up(m, tm)

    x2d = x.reshape(m, h).astype(jnp.bfloat16)
    if m_pad != m or h_pad != h:
        x2d = jnp.pad(x2d, ((0, m_pad - m), (0, h_pad - h)))

    n_row_tiles = m_pad // tm
    flops = 4 * m_pad * h_pad * h4_pad  # two matmuls, 2*M*H*4H each
    # Weights are re-streamed once per row tile.
    bytes_accessed = (
        x2d.size * 2
        + n_row_tiles * (w1.size * 2 + w2.size * 2 + b1.size * 4 + b2.size * 4)
        + m_pad * h_pad * out_itemsize)

    out2d = pl.pallas_call(
        ffn_kernel,
        out_shape=jax.ShapeDtypeStruct((m_pad, h_pad), out_dtype),
        grid_spec=pltpu.PrefetchScalarGridSpec(
            num_scalar_prefetch=0,
            grid=(m_pad // tm, h4_pad // tn),
            in_specs=[
                pl.BlockSpec((tm, h_pad), lambda i, j: (i, 0)),   # x row tile
                pl.BlockSpec((h_pad, tn), lambda i, j: (0, j)),   # W1 col slab
                pl.BlockSpec((1, tn), lambda i, j: (0, j)),       # b1 slab
                pl.BlockSpec((tn, h_pad), lambda i, j: (j, 0)),   # W2 row slab
                pl.BlockSpec((1, h_pad), lambda i, j: (0, 0)),    # b2 (const)
            ],
            out_specs=pl.BlockSpec((tm, h_pad), lambda i, j: (i, 0)),
            scratch_shapes=[pltpu.VMEM((tm, h_pad), jnp.float32)],
        ),
        compiler_params=pltpu.CompilerParams(
            dimension_semantics=("parallel", "arbitrary"),
            vmem_limit_bytes=vmem_limit,
        ),
        cost_estimate=pl.CostEstimate(
            flops=flops, transcendentals=0, bytes_accessed=int(bytes_accessed)),
    )(x2d, w1, b1, w2, b2)

    return out2d[:m, :h].reshape(b, s, h)


# --------------------------------------------------------------------------- #
# Init (mimics torch.nn.Linear's U(-1/sqrt(fan_in), 1/sqrt(fan_in)))
# --------------------------------------------------------------------------- #
def init_ffn_params(key, hidden_dim, dtype=jnp.float32):
    h4 = 4 * hidden_dim
    k1, k2, k3, k4 = jax.random.split(key, 4)
    bound1 = 1.0 / (hidden_dim ** 0.5)
    bound2 = 1.0 / (h4 ** 0.5)
    # Stored already transposed w.r.t. torch.nn.Linear.weight.
    w1 = jax.random.uniform(k1, (hidden_dim, h4), dtype, -bound1, bound1)
    b1 = jax.random.uniform(k2, (h4,), dtype, -bound1, bound1)
    w2 = jax.random.uniform(k3, (h4, hidden_dim), dtype, -bound2, bound2)
    b2 = jax.random.uniform(k4, (hidden_dim,), dtype, -bound2, bound2)
    return w1, b1, w2, b2


if __name__ == "__main__":
    key = jax.random.PRNGKey(0)
    k_x, k_p = jax.random.split(key)

    batch, seq, hidden = 2, 8, 32
    x = jax.random.normal(k_x, (batch, seq, hidden), jnp.float32)
    w1, b1, w2, b2 = init_ffn_params(k_p, hidden)
    params = prepare_ffn_params(w1, b1, w2, b2)   # one-time pad + bf16 pre-cast

    out = ffn_forward(x, params)
    out = jax.block_until_ready(out)
    assert out.shape == x.shape

    # Reference with the same bf16 MXU-operand precision (f32 accumulation).
    xb = x.astype(jnp.bfloat16)
    h_ref = jnp.dot(xb, w1.astype(jnp.bfloat16),
                    preferred_element_type=jnp.float32) + b1
    h_ref = jnp.maximum(h_ref, 0.0)
    ref_bf16 = jnp.dot(h_ref.astype(jnp.bfloat16), w2.astype(jnp.bfloat16),
                       preferred_element_type=jnp.float32) + b2
    assert jnp.allclose(out, ref_bf16, atol=2e-3, rtol=2e-3)

    # Loose sanity check against the full-f32 PyTorch-equivalent math.
    ref_f32 = jnp.maximum(x @ w1 + b1, 0.0) @ w2 + b2
    assert jnp.allclose(out, ref_f32, atol=5e-2, rtol=5e-2)

    print("KERNEL_OK")
</pallas_src>

<mosaic_0001>
module attributes {stable_mosaic.version = 11 : i64} {
  func.func @ffn_kernel(%arg0: i32, %arg1: i32, %arg2: memref<16x128xbf16, #tpu.memory_space<vmem>>, %arg3: memref<128x128xbf16, #tpu.memory_space<vmem>>, %arg4: memref<1x128xf32, #tpu.memory_space<vmem>>, %arg5: memref<128x128xbf16, #tpu.memory_space<vmem>>, %arg6: memref<1x128xf32, #tpu.memory_space<vmem>>, %arg7: memref<16x128xf32, #tpu.memory_space<vmem>>, %arg8: memref<16x128xf32, #tpu.memory_space<vmem>>) attributes {dimension_semantics = [#tpu.dimension_semantics<parallel>, #tpu.dimension_semantics<arbitrary>], iteration_bounds = array<i64: 1, 1>, scalar_prefetch = 0 : i64, scratch_operands = 1 : i64, tpu.core_type = #tpu.core_type<tc>, window_params = [{transform_indices = @transform_0, window_bounds = array<i64: 16, 128>}, {transform_indices = @transform_1, window_bounds = array<i64: 128, 128>}, {transform_indices = @transform_2, window_bounds = array<i64: 1, 128>}, {transform_indices = @transform_3, window_bounds = array<i64: 128, 128>}, {pipeline_mode = #tpu.pipeline_mode<synchronous>, transform_indices = @transform_4, window_bounds = array<i64: 1, 128>}, {transform_indices = @transform_5, window_bounds = array<i64: 16, 128>}]} {
    %c0 = arith.constant 0 : index
    %c0_0 = arith.constant 0 : index
    %0 = vector.load %arg2[%c0, %c0_0] : memref<16x128xbf16, #tpu.memory_space<vmem>>, vector<16x128xbf16>
    %c0_1 = arith.constant 0 : index
    %c0_2 = arith.constant 0 : index
    %1 = vector.load %arg3[%c0_1, %c0_2] : memref<128x128xbf16, #tpu.memory_space<vmem>>, vector<128x128xbf16>
    %cst = arith.constant dense<0.000000e+00> : vector<16x128xf32>
    %2 = tpu.matmul %0, %1, %cst {dimension_numbers = #tpu.dot_dimension_numbers<[1], [0], [0], [1], [0, 0, 1, 1], [], []>} : vector<16x128xbf16>, vector<128x128xbf16>, vector<16x128xf32> -> vector<16x128xf32>
    %c0_3 = arith.constant 0 : index
    %c0_4 = arith.constant 0 : index
    %3 = vector.load %arg4[%c0_3, %c0_4] : memref<1x128xf32, #tpu.memory_space<vmem>>, vector<1x128xf32>
    %4 = vector.broadcast %3 : vector<1x128xf32> to vector<16x128xf32>
    %5 = arith.addf %2, %4 : vector<16x128xf32>
    %cst_5 = arith.constant 0.000000e+00 : f32
    %6 = vector.broadcast %cst_5 : f32 to vector<16x128xf32>
    %7 = arith.maximumf %5, %6 : vector<16x128xf32>
    %8 = arith.truncf %7 : vector<16x128xf32> to vector<16x128xbf16>
    %c0_6 = arith.constant 0 : index
    %c0_7 = arith.constant 0 : index
    %9 = vector.load %arg5[%c0_6, %c0_7] : memref<128x128xbf16, #tpu.memory_space<vmem>>, vector<128x128xbf16>
    %cst_8 = arith.constant dense<0.000000e+00> : vector<16x128xf32>
    %10 = tpu.matmul %8, %9, %cst_8 {dimension_numbers = #tpu.dot_dimension_numbers<[1], [0], [0], [1], [0, 0, 1, 1], [], []>} : vector<16x128xbf16>, vector<128x128xbf16>, vector<16x128xf32> -> vector<16x128xf32>
    %c0_i32 = arith.constant 0 : i32
    %11 = arith.cmpi eq, %arg1, %c0_i32 : i32
    %12 = arith.extui %11 : i1 to i32
    %c0_i32_9 = arith.constant 0 : i32
    %13 = arith.cmpi ne, %12, %c0_i32_9 : i32
    scf.if %13 {
      %c0_14 = arith.constant 0 : index
      %c0_15 = arith.constant 0 : index
      %20 = vector.load %arg8[%c0_14, %c0_15] : memref<16x128xf32, #tpu.memory_space<vmem>>, vector<16x128xf32>
      tpu.vector_store %arg8[%c0_14, %c0_15], %10 {strides = array<i32>} : memref<16x128xf32, #tpu.memory_space<vmem>>, vector<16x128xf32>,
    } else {
    }
    %c0_i32_10 = arith.constant 0 : i32
    %14 = arith.cmpi sgt, %arg1, %c0_i32_10 : i32
    %15 = arith.extui %14 : i1 to i32
    %c0_i32_11 = arith.constant 0 : i32
    %16 = arith.cmpi ne, %15, %c0_i32_11 : i32
    scf.if %16 {
      %c0_14 = arith.constant 0 : index
      %c0_15 = arith.constant 0 : index
      %20 = vector.load %arg8[%c0_14, %c0_15] : memref<16x128xf32, #tpu.memory_space<vmem>>, vector<16x128xf32>
      %21 = arith.addf %20, %10 : vector<16x128xf32>
      %c0_16 = arith.constant 0 : index
      %c0_17 = arith.constant 0 : index
      %22 = vector.load %arg8[%c0_16, %c0_17] : memref<16x128xf32, #tpu.memory_space<vmem>>, vector<16x128xf32>
      tpu.vector_store %arg8[%c0_16, %c0_17], %21 {strides = array<i32>} : memref<16x128xf32, #tpu.memory_space<vmem>>, vector<16x128xf32>,
    } else {
    }
    %c0_i32_12 = arith.constant 0 : i32
    %17 = arith.cmpi eq, %arg1, %c0_i32_12 : i32
    %18 = arith.extui %17 : i1 to i32
    %c0_i32_13 = arith.constant 0 : i32
    %19 = arith.cmpi ne, %18, %c0_i32_13 : i32
    scf.if %19 {
      %c0_14 = arith.constant 0 : index
      %c0_15 = arith.constant 0 : index
      %20 = vector.load %arg8[%c0_14, %c0_15] : memref<16x128xf32, #tpu.memory_space<vmem>>, vector<16x128xf32>
      %c0_16 = arith.constant 0 : index
      %c0_17 = arith.constant 0 : index
      %21 = vector.load %arg6[%c0_16, %c0_17] : memref<1x128xf32, #tpu.memory_space<vmem>>, vector<1x128xf32>
      %22 = vector.broadcast %21 : vector<1x128xf32> to vector<16x128xf32>
      %23 = arith.addf %20, %22 : vector<16x128xf32>
      %c0_18 = arith.constant 0 : index
      %c0_19 = arith.constant 0 : index
      %24 = vector.load %arg7[%c0_18, %c0_19] : memref<16x128xf32, #tpu.memory_space<vmem>>, vector<16x128xf32>
      tpu.vector_store %arg7[%c0_18, %c0_19], %23 {strides = array<i32>} : memref<16x128xf32, #tpu.memory_space<vmem>>, vector<16x128xf32>,
    } else {
    }
    return
  }
  func.func @transform_0(%arg0: i32, %arg1: i32) -> (i32, i32) {
    %c0_i32 = arith.constant 0 : i32
    %c0_i32_0 = arith.constant 0 : i32
    return %arg0, %c0_i32 : i32, i32
  }
  func.func @transform_1(%arg0: i32, %arg1: i32) -> (i32, i32) {
    %c0_i32 = arith.constant 0 : i32
    %c0_i32_0 = arith.constant 0 : i32
    return %c0_i32, %arg1 : i32, i32
  }
  func.func @transform_2(%arg0: i32, %arg1: i32) -> (i32, i32) {
    %c0_i32 = arith.constant 0 : i32
    %c0_i32_0 = arith.constant 0 : i32
    return %c0_i32, %arg1 : i32, i32
  }
  func.func @transform_3(%arg0: i32, %arg1: i32) -> (i32, i32) {
    %c0_i32 = arith.constant 0 : i32
    %c0_i32_0 = arith.constant 0 : i32
    return %arg1, %c0_i32 : i32, i32
  }
  func.func @transform_4(%arg0: i32, %arg1: i32) -> (i32, i32) {
    %c0_i32 = arith.constant 0 : i32
    %c0_i32_0 = arith.constant 0 : i32
    %c0_i32_1 = arith.constant 0 : i32
    return %c0_i32, %c0_i32_0 : i32, i32
  }
  func.func @transform_5(%arg0: i32, %arg1: i32) -> (i32, i32) {
    %c0_i32 = arith.constant 0 : i32
    %c0_i32_0 = arith.constant 0 : i32
    return %arg0, %c0_i32 : i32, i32
  }
}

</mosaic_0001>

<llo_original>
// kernel: tpu_custom_call.1
$region0: #{tpu_custom_call.1}
  #allocation0 [shape = 'u32[]', space=smem, size = 0x4, offset = 0x4, fixed_abs, tag = 'smem constant byte address 0x4 - core index']
  #allocation1 [shape = 'u32[144,128]{1,0:T(1,128)}', space=vmem, size = 0x12000, scoped, tag = 'internal scratch']
  #allocation2 [shape = 'f32[16,128]{1,0:T(8,128)}', space=vmem, size = 0x2000, scoped, tag = 'scratch operand']
  %s0 = inlined_call_operand.hbm [shape: bf16[16,128], index: 0, kind: input, shape index: {}]
  %s1 = inlined_call_operand.hbm [shape: bf16[128,128], index: 1, kind: input, shape index: {}]
  %s2 = inlined_call_operand.vmem [shape: f32[1,128], index: 2, kind: input, shape index: {}]
  %s3 = inlined_call_operand.hbm [shape: bf16[128,128], index: 3, kind: input, shape index: {}]
  %s4 = inlined_call_operand.vmem [shape: f32[1,128], index: 4, kind: input, shape index: {}]
  %s5 = inlined_call_operand.hbm [shape: f32[16,128], index: 5, kind: output, shape index: {}]
  %s6 = sld [smem:[#allocation0]]
  $region54: #{tpu_custom_call.1} parent=0
    _
  %s8 = ssub.s32 1, %s6
  %s9 = scalar_select 0, %s8, %s6
  $region1: #{tpu_custom_call.1} parent=0
    #allocation3 [shape = 'u8[4096]{0}', space=vmem, size = 0x1000, scoped, tag = 'input window, operand 0, single buffered']
    #allocation4 [shape = 's32[1]{0}', space=sflag, size = 0x4, scoped, tag = 'scoped memory for tpu_custom_call.1']
    #allocation5 [shape = 's32[1]{0}', space=sflag, size = 0x4, scoped, tag = 'scoped memory for tpu_custom_call.1']
    #allocation6 [shape = 'u8[32768]{0}', space=vmem, size = 0x8000, scoped, tag = 'input window, operand 1, single buffered']
    #allocation7 [shape = 's32[1]{0}', space=sflag, size = 0x4, scoped, tag = 'scoped memory for tpu_custom_call.1']
    #allocation8 [shape = 'u8[32768]{0}', space=vmem, size = 0x8000, scoped, tag = 'input window, operand 3, single buffered']
    #allocation9 [shape = 'u8[8192]{0}', space=vmem, size = 0x2000, scoped, tag = 'output window, operand 0, single buffered']
    %10 = vsyncpa [#allocation4], 0
    %11 = vsyncpa [#allocation7], 0
    %12 = vsyncpa [#allocation5], 0
    // Predicated region
    $region2: #{tpu_custom_call.1} parent=1 // pred_check
      _
    $region3: #{tpu_custom_call.1} parent=1 // pred_check_branch
      %14 = sbr.rel (0) target = $region5
    $region4: #{tpu_custom_call.1} parent=1 // pred_region
      %s16 = ssub.s32 128, 128
      %17 = vsyncadd [#allocation4], %s16
      %s18 = sshll.u32 [#allocation3], 4
      %s19 = int_to_ptr.vmem [resolvable:$true] %s18
      %24 = dma.hbm_to_vmem [thread:$0]  %s0, 128, %s19, [#allocation4], 64, 64, 4
    $region5: #{tpu_custom_call.1} parent=1 // pred_fallthru
      _
    // Predicated region
    $region6: #{tpu_custom_call.1} parent=1 // pred_check
      _
    $region7: #{tpu_custom_call.1} parent=1 // pred_check_branch
      %26 = sbr.rel (0) target = $region9
    $region8: #{tpu_custom_call.1} parent=1 // pred_region
      %s28 = ssub.s32 1024, 1024
      %29 = vsyncadd [#allocation7], %s28
      %s30 = sshll.u32 [#allocation6], 4
      %s31 = int_to_ptr.vmem [resolvable:$true] %s30
      %36 = dma.hbm_to_vmem [thread:$0]  %s1, 1024, %s31, [#allocation7], 64, 64, 4
    $region9: #{tpu_custom_call.1} parent=1 // pred_fallthru
      _
    // Predicated region
    $region10: #{tpu_custom_call.1} parent=1 // pred_check
      _
    $region11: #{tpu_custom_call.1} parent=1 // pred_check_branch
      %38 = sbr.rel (0) target = $region13
    $region12: #{tpu_custom_call.1} parent=1 // pred_region
      _
    $region13: #{tpu_custom_call.1} parent=1 // pred_fallthru
      _
    // Predicated region
    $region14: #{tpu_custom_call.1} parent=1 // pred_check
      _
    $region15: #{tpu_custom_call.1} parent=1 // pred_check_branch
      %40 = sbr.rel (0) target = $region17
    $region16: #{tpu_custom_call.1} parent=1 // pred_region
      %s42 = ssub.s32 1024, 1024
      %43 = vsyncadd [#allocation7], %s42
      %s44 = sshll.u32 [#allocation8], 4
      %s45 = int_to_ptr.vmem [resolvable:$true] %s44
      %50 = dma.hbm_to_vmem [thread:$0]  %s3, 1024, %s45, [#allocation7], 64, 64, 4
    $region17: #{tpu_custom_call.1} parent=1 // pred_fallthru
      _
    // Predicated region
    $region18: #{tpu_custom_call.1} parent=1 // pred_check
      _
    $region19: #{tpu_custom_call.1} parent=1 // pred_check_branch
      %52 = sbr.rel (0) target = $region21
    $region20: #{tpu_custom_call.1} parent=1 // pred_region
      _
    $region21: #{tpu_custom_call.1} parent=1 // pred_fallthru
      _
    // Predicated region
    $region22: #{tpu_custom_call.1} parent=1 // pred_check
      _
    $region23: #{tpu_custom_call.1} parent=1 // pred_check_branch
      %54 = sbr.rel (0) target = $region25
    $region24: #{tpu_custom_call.1} parent=1 // pred_region
      %55 = dma.done [#allocation4], 128
    $region25: #{tpu_custom_call.1} parent=1 // pred_fallthru
      _
    // Predicated region
    $region26: #{tpu_custom_call.1} parent=1 // pred_check
      _
    $region27: #{tpu_custom_call.1} parent=1 // pred_check_branch
      %57 = sbr.rel (0) target = $region29
    $region28: #{tpu_custom_call.1} parent=1 // pred_region
      %58 = dma.done [#allocation7], 1024
    $region29: #{tpu_custom_call.1} parent=1 // pred_fallthru
      _
    // Predicated region
    $region30: #{tpu_custom_call.1} parent=1 // pred_check
      _
    $region31: #{tpu_custom_call.1} parent=1 // pred_check_branch
      %60 = sbr.rel (0) target = $region33
    $region32: #{tpu_custom_call.1} parent=1 // pred_region
      %61 = dma.done [#allocation7], 1024
    $region33: #{tpu_custom_call.1} parent=1 // pred_fallthru
      _
    %v63 = vld [vmem:[#allocation3] sm:$0xf]
    %v64 = vld [vmem:[#allocation3 + $0x4] sm:$0xf]
    %v65 = vld [vmem:[#allocation6] sm:$0xf]
    %v66 = vld [vmem:[#allocation6 + $0x4] sm:$0xf]
    %v67 = vld [vmem:[#allocation6 + $0x8] sm:$0xf]
    %v68 = vld [vmem:[#allocation6 + $0xc] sm:$0xf]
    %v69 = vld [vmem:[#allocation6 + $0x10] sm:$0xf]
    %v70 = vld [vmem:[#allocation6 + $0x14] sm:$0xf]
    %v71 = vld [vmem:[#allocation6 + $0x18] sm:$0xf]
    %v72 = vld [vmem:[#allocation6 + $0x1c] sm:$0xf]
    %v73 = vld [vmem:[#allocation6 + $0x20] sm:$0xf]
    %v74 = vld [vmem:[#allocation6 + $0x24] sm:$0xf]
    %v75 = vld [vmem:[#allocation6 + $0x28] sm:$0xf]
    %v76 = vld [vmem:[#allocation6 + $0x2c] sm:$0xf]
    %v77 = vld [vmem:[#allocation6 + $0x30] sm:$0xf]
    %v78 = vld [vmem:[#allocation6 + $0x34] sm:$0xf]
    %v79 = vld [vmem:[#allocation6 + $0x38] sm:$0xf]
    %v80 = vld [vmem:[#allocation6 + $0x3c] sm:$0xf]
    %v81 = vld [vmem:[%s2] sm:$0x1]
    %v83 = vlaneseq
    %v84 = vshrl.u32 %v83, 7
    %v85 = vsub.s32 0, %v84
    %v86 = vrot.slane %v81, %v85
    %v90 = vunpack.c.l.b16 %v63
    %v91 = vunpack.c.l.b16 %v64
    %v92 = vpack.c.b16 %v91, %v90
    %v110 = vunpack.c.l.b16 %v65
    %v111 = vunpack.c.l.b16 %v66
    %v112 = vunpack.c.l.b16 %v67
    %v113 = vunpack.c.l.b16 %v68
    %v114 = vunpack.c.l.b16 %v69
    %v115 = vunpack.c.l.b16 %v70
    %v116 = vunpack.c.l.b16 %v71
    %v117 = vunpack.c.l.b16 %v72
    %v118 = vunpack.c.l.b16 %v73
    %v119 = vunpack.c.l.b16 %v74
    %v120 = vunpack.c.l.b16 %v75
    %v121 = vunpack.c.l.b16 %v76
    %v122 = vunpack.c.l.b16 %v77
    %v123 = vunpack.c.l.b16 %v78
    %v124 = vunpack.c.l.b16 %v79
    %v125 = vunpack.c.l.b16 %v80
    %v126 = vpack.c.b16 %v111, %v110
    %v127 = vpack.c.b16 %v113, %v112
    %v128 = vpack.c.b16 %v115, %v114
    %v129 = vpack.c.b16 %v117, %v116
    %v130 = vpack.c.b16 %v119, %v118
    %v131 = vpack.c.b16 %v121, %v120
    %v132 = vpack.c.b16 %v123, %v122
    %v133 = vpack.c.b16 %v125, %v124
    %142 = vmatprep.subr.bf16.mxu0 0
    %143 = vmatpush1.bf16.msra.mxu0 %v133
    %144 = vmatprep.subr.bf16.mxu0 0
    %145 = vmatpush1.bf16.msra.mxu0 %v132
    %146 = vmatprep.subr.bf16.mxu0 0
    %147 = vmatpush1.bf16.msra.mxu0 %v131
    %148 = vmatprep.subr.bf16.mxu0 0
    %149 = vmatpush1.bf16.msra.mxu0 %v130
    %150 = vmatprep.subr.bf16.mxu0 0
    %151 = vmatpush1.bf16.msra.mxu0 %v129
    %152 = vmatprep.subr.bf16.mxu0 0
    %153 = vmatpush1.bf16.msra.mxu0 %v128
    %154 = vmatprep.subr.bf16.mxu0 0
    %155 = vmatpush1.bf16.msra.mxu0 %v127
    %156 = vmatprep.subr.bf16.mxu0 0
    %157 = vmatpush1.bf16.msra.mxu0 %v126
    %158 = vmatprep.subr.bf16.mxu0 0
    %159 = vmatpush2.bf16.msra.mxu0 0
    %160 = vmatprep.subr.bf16.mxu0 0
    %161 = vmatpush2.bf16.msra.mxu0 0
    %162 = vmatprep.subr.bf16.mxu0 0
    %163 = vmatpush2.bf16.msra.mxu0 0
    %164 = vmatprep.subr.bf16.mxu0 0
    %165 = vmatpush2.bf16.msra.mxu0 0
    %166 = vmatprep.subr.bf16.mxu0 0
    %167 = vmatpush2.bf16.msra.mxu0 0
    %168 = vmatprep.subr.bf16.mxu0 0
    %169 = vmatpush2.bf16.msra.mxu0 0
    %170 = vmatprep.subr.bf16.mxu0 0
    %171 = vmatpush2.bf16.msra.mxu0 0
    %172 = vmatprep.subr.bf16.mxu0 0
    %173 = vmatpush2.bf16.msra.mxu0 0
    %174 = vmatprep.mubr.bf16.mxu0 0
    %175 = vmatmul.mubr.bf16.gmra.mxu0 %v92
    %v176 = vpop.f32.mrf.mxu0
    %v177 = vadd.f32 %v86, %v176
    %v178 = vpop.f32.mrf.mxu0
    %v179 = vpop.f32.mrf.mxu0
    %v180 = vadd.f32 %v86, %v179
    %v181 = vpop.f32.mrf.mxu0
    %182 = vdwg.mxu0
    %v183 = vmax.f32 %v177, 0.0
    %v184 = vmax.f32 %v180, 0.0
    %v185 = vpack.c.bf16 %v184, %v183
    %v186 = vld [vmem:[#allocation8] sm:$0xf]
    %v187 = vld [vmem:[#allocation8 + $0x4] sm:$0xf]
    %v188 = vld [vmem:[#allocation8 + $0x8] sm:$0xf]
    %v189 = vld [vmem:[#allocation8 + $0xc] sm:$0xf]
    %v190 = vld [vmem:[#allocation8 + $0x10] sm:$0xf]
    %v191 = vld [vmem:[#allocation8 + $0x14] sm:$0xf]
    %v192 = vld [vmem:[#allocation8 + $0x18] sm:$0xf]
    %v193 = vld [vmem:[#allocation8 + $0x1c] sm:$0xf]
    %v194 = vld [vmem:[#allocation8 + $0x20] sm:$0xf]
    %v195 = vld [vmem:[#allocation8 + $0x24] sm:$0xf]
    %v196 = vld [vmem:[#allocation8 + $0x28] sm:$0xf]
    %v197 = vld [vmem:[#allocation8 + $0x2c] sm:$0xf]
    %v198 = vld [vmem:[#allocation8 + $0x30] sm:$0xf]
    %v199 = vld [vmem:[#allocation8 + $0x34] sm:$0xf]
    %v200 = vld [vmem:[#allocation8 + $0x38] sm:$0xf]
    %v201 = vld [vmem:[#allocation8 + $0x3c] sm:$0xf]
    %v218 = vunpack.c.l.b16 %v186
    %v219 = vunpack.c.l.b16 %v187
    %v220 = vunpack.c.l.b16 %v188
    %v221 = vunpack.c.l.b16 %v189
    %v222 = vunpack.c.l.b16 %v190
    %v223 = vunpack.c.l.b16 %v191
    %v224 = vunpack.c.l.b16 %v192
    %v225 = vunpack.c.l.b16 %v193
    %v226 = vunpack.c.l.b16 %v194
    %v227 = vunpack.c.l.b16 %v195
    %v228 = vunpack.c.l.b16 %v196
    %v229 = vunpack.c.l.b16 %v197
    %v230 = vunpack.c.l.b16 %v198
    %v231 = vunpack.c.l.b16 %v199
    %v232 = vunpack.c.l.b16 %v200
    %v233 = vunpack.c.l.b16 %v201
    %v234 = vpack.c.b16 %v219, %v218
    %v235 = vpack.c.b16 %v221, %v220
    %v236 = vpack.c.b16 %v223, %v222
    %v237 = vpack.c.b16 %v225, %v224
    %v238 = vpack.c.b16 %v227, %v226
    %v239 = vpack.c.b16 %v229, %v228
    %v240 = vpack.c.b16 %v231, %v230
    %v241 = vpack.c.b16 %v233, %v232
    %250 = vmatprep.subr.bf16.mxu0 0
    %251 = vmatpush1.bf16.msra.mxu0 %v241
    %252 = vmatprep.subr.bf16.mxu0 0
    %253 = vmatpush1.bf16.msra.mxu0 %v240
    %254 = vmatprep.subr.bf16.mxu0 0
    %255 = vmatpush1.bf16.msra.mxu0 %v239
    %256 = vmatprep.subr.bf16.mxu0 0
    %257 = vmatpush1.bf16.msra.mxu0 %v238
    %258 = vmatprep.subr.bf16.mxu0 0
    %259 = vmatpush1.bf16.msra.mxu0 %v237
    %260 = vmatprep.subr.bf16.mxu0 0
    %261 = vmatpush1.bf16.msra.mxu0 %v236
    %262 = vmatprep.subr.bf16.mxu0 0
    %263 = vmatpush1.bf16.msra.mxu0 %v235
    %264 = vmatprep.subr.bf16.mxu0 0
    %265 = vmatpush1.bf16.msra.mxu0 %v234
    %266 = vmatprep.subr.bf16.mxu0 0
    %267 = vmatpush2.bf16.msra.mxu0 0
    %268 = vmatprep.subr.bf16.mxu0 0
    %269 = vmatpush2.bf16.msra.mxu0 0
    %270 = vmatprep.subr.bf16.mxu0 0
    %271 = vmatpush2.bf16.msra.mxu0 0
    %272 = vmatprep.subr.bf16.mxu0 0
    %273 = vmatpush2.bf16.msra.mxu0 0
    %274 = vmatprep.subr.bf16.mxu0 0
    %275 = vmatpush2.bf16.msra.mxu0 0
    %276 = vmatprep.subr.bf16.mxu0 0
    %277 = vmatpush2.bf16.msra.mxu0 0
    %278 = vmatprep.subr.bf16.mxu0 0
    %279 = vmatpush2.bf16.msra.mxu0 0
    %280 = vmatprep.subr.bf16.mxu0 0
    %281 = vmatpush2.bf16.msra.mxu0 0
    %282 = vmatprep.mubr.bf16.mxu0 0
    %283 = vmatmul.mubr.bf16.gmra.mxu0 %v185
    %v284 = vpop.f32.mrf.mxu0
    %v285 = vadd.f32 0.0, %v284
    %v286 = vpop.f32.mrf.mxu0
    %v287 = vpop.f32.mrf.mxu0
    %v288 = vadd.f32 0.0, %v287
    %v289 = vpop.f32.mrf.mxu0
    %290 = vdwg.mxu0
    %p291 = scmp.eq.s32.totalorder 0, 0
    // Predicated region
    $region34: #{tpu_custom_call.1} parent=1 // pred_check
      %p292 = pneg %p291
    $region35: #{tpu_custom_call.1} parent=1 // pred_check_branch
      %294 = sbr.rel (%p292) target = $region37
    $region36: #{tpu_custom_call.1} parent=1 // pred_region
      %295 = vst [vmem:[#allocation2] sm:$0xff] %v285
      %296 = vst [vmem:[#allocation2 + $0x8] sm:$0xff] %v288
    $region37: #{tpu_custom_call.1} parent=1 // pred_fallthru
      _
    %p297 = scmp.gt.s32.totalorder 0, 0
    // Predicated region
    $region38: #{tpu_custom_call.1} parent=1 // pred_check
      %p298 = pneg %p297
    $region39: #{tpu_custom_call.1} parent=1 // pred_check_branch
      %300 = sbr.rel (%p298) target = $region41
    $region40: #{tpu_custom_call.1} parent=1 // pred_region
      %v301 = vld [vmem:[#allocation2] sm:$0xff]
      %v302 = vld [vmem:[#allocation2 + $0x8] sm:$0xff]
      %v303 = vadd.f32 %v301, %v285
      %v304 = vadd.f32 %v302, %v288
      %305 = vst [vmem:[#allocation2] sm:$0xff] %v303
      %306 = vst [vmem:[#allocation2 + $0x8] sm:$0xff] %v304
    $region41: #{tpu_custom_call.1} parent=1 // pred_fallthru
      _
    // Predicated region
    $region42: #{tpu_custom_call.1} parent=1 // pred_check
      %p307 = pneg %p291
    $region43: #{tpu_custom_call.1} parent=1 // pred_check_branch
      %309 = sbr.rel (%p307) target = $region45
    $region44: #{tpu_custom_call.1} parent=1 // pred_region
      %v310 = vld [vmem:[#allocation2] sm:$0xff]
      %v311 = vld [vmem:[#allocation2 + $0x8] sm:$0xff]
      %v312 = vld [vmem:[%s4] sm:$0x1]
      %v314 = vlaneseq
      %v315 = vshrl.u32 %v314, 7
      %v316 = vsub.s32 0, %v315
      %v317 = vrot.slane %v312, %v316
      %v319 = vadd.f32 %v310, %v317
      %v320 = vadd.f32 %v311, %v317
      %321 = vst [vmem:[#allocation9] sm:$0xff] %v319
      %322 = vst [vmem:[#allocation9 + $0x8] sm:$0xff] %v320
    $region45: #{tpu_custom_call.1} parent=1 // pred_fallthru
      _
    // Predicated region
    $region46: #{tpu_custom_call.1} parent=1 // pred_check
      _
    $region47: #{tpu_custom_call.1} parent=1 // pred_check_branch
      %324 = sbr.rel (0) target = $region49
    $region48: #{tpu_custom_call.1} parent=1 // pred_region
      %s326 = ssub.s32 256, 256
      %327 = vsyncadd [#allocation5], %s326
      %s328 = sshll.u32 [#allocation9], 4
      %s329 = int_to_ptr.vmem [resolvable:$true] %s328
      %334 = dma.vmem_to_hbm [thread:$0]  %s329, 256, %s5, [#allocation5], 128, 128, 8
    $region49: #{tpu_custom_call.1} parent=1 // pred_fallthru
      _
    // Predicated region
    $region50: #{tpu_custom_call.1} parent=1 // pred_check
      _
    $region51: #{tpu_custom_call.1} parent=1 // pred_check_branch
      %336 = sbr.rel (0) target = $region53
    $region52: #{tpu_custom_call.1} parent=1 // pred_region
      %337 = dma.done [#allocation5], 256
    $region53: #{tpu_custom_call.1} parent=1 // pred_fallthru
      _
    %338 = vsyncpa [#allocation4], 1
    %339 = vsyncpa [#allocation7], 1
    %340 = vsyncpa [#allocation5], 1

</llo_original>
